<compile_context>
chip_gen: v6e
topology: v6e:2x2x1
jax: 0.10.0
libtpu: 0.0.40
codegen_flags: <defaults>
</compile_context>

<pallas_src>
import functools

import jax
import jax.numpy as jnp
from jax.experimental import pallas as pl
from jax.experimental.pallas import tpu as pltpu

NUM_BITS = 8
BOUND = float(2 ** (NUM_BITS - 1) - 1)  # 127.0, narrow-range symmetric

_TARGET_TILE_ELEMS = 1024 * 1024      # 4 MiB of f32 per stream per tile
_RESIDENT_MAX_ELEMS = 512 * 1024      # <= this many slab elems -> single pass
_VMEM_LIMIT_BYTES = 32 * 1024 * 1024  # <= physical VMEM on v5e/v6e/v7x


# ---------------- kernels ----------------

def _fused_resident_kernel(x_ref, y_ref, o_ref):
    """Single-pass amax + fake-quant + add; whole slabs resident in VMEM."""
    x = x_ref[...].astype(jnp.float32)
    y = y_ref[...].astype(jnp.float32)
    ax = jnp.max(jnp.abs(x))
    ay = jnp.max(jnp.abs(y))
    inv_sx = jnp.where(ax > 0.0, BOUND / jnp.maximum(ax, 1e-30), 0.0)
    inv_sy = jnp.where(ay > 0.0, BOUND / jnp.maximum(ay, 1e-30), 0.0)
    deq_x = ax * (1.0 / BOUND)
    deq_y = ay * (1.0 / BOUND)
    qx = jnp.clip(jnp.round(x * inv_sx), -BOUND, BOUND) * deq_x
    qy = jnp.clip(jnp.round(y * inv_sy), -BOUND, BOUND) * deq_y
    o_ref[...] = (qx + qy).astype(o_ref.dtype)


def _amax2_partials_kernel(x_ref, y_ref, px_ref, py_ref, *, tm, rows, masked):
    """Per-block partial max|x|, max|y| -> (8, lanes) partials.

    The (tm, lanes) tile is folded vreg-wise over the (tm//8) sublane groups
    (pure VPU maxes); the tiny cross-lane/final reduce happens in the wrapper.
    The ragged last block (rows % tm != 0) is masked with a static compare.
    """
    ax = jnp.abs(x_ref[...].astype(jnp.float32))
    ay = jnp.abs(y_ref[...].astype(jnp.float32))
    if masked:
        i = pl.program_id(0)
        ridx = i * tm + jax.lax.broadcasted_iota(jnp.int32, ax.shape, 0)
        valid = ridx < rows
        ax = jnp.where(valid, ax, 0.0)
        ay = jnp.where(valid, ay, 0.0)
    lanes = ax.shape[-1]
    px_ref[...] = jnp.max(ax.reshape(tm // 8, 8, lanes), axis=0)
    py_ref[...] = jnp.max(ay.reshape(tm // 8, 8, lanes), axis=0)


def _fq_add_kernel(p_ref, x_ref, y_ref, o_ref):
    """Fused fake-quantize(x) + fake-quantize(y) + add.

    p_ref (SMEM, f32[4]) = [inv_scale_x, dequant_x, inv_scale_y, dequant_y]
    where inv_scale = 127/amax (0 if amax == 0) and dequant = amax/127.
    Per-element work is mul/round/clip/mul — no divides.
    """
    inv_sx = p_ref[0]
    deq_x = p_ref[1]
    inv_sy = p_ref[2]
    deq_y = p_ref[3]

    x = x_ref[...].astype(jnp.float32)
    y = y_ref[...].astype(jnp.float32)

    qx = jnp.clip(jnp.round(x * inv_sx), -BOUND, BOUND) * deq_x
    qy = jnp.clip(jnp.round(y * inv_sy), -BOUND, BOUND) * deq_y

    o_ref[...] = (qx + qy).astype(o_ref.dtype)


def _plain_add_kernel(x_ref, y_ref, o_ref):
    o_ref[...] = x_ref[...] + y_ref[...]


# ---------------- layout helpers ----------------

def _choose_lanes(total):
    """Widest lane count in {1024,512,256,128} dividing total, else 128."""
    for cand in (1024, 512, 256, 128):
        if total % cand == 0:
            return cand
    return 128


def _sublane_multiple(dtype):
    return {4: 8, 2: 16, 1: 32}.get(jnp.dtype(dtype).itemsize, 8)


def _to_slab(arr, lanes):
    flat = arr.reshape(-1)
    rows = pl.cdiv(flat.size, lanes)
    padded = rows * lanes
    if padded != flat.size:
        # TODO(synk): only reached when total % 128 != 0; zero-pad is a small
        # extra HBM copy but zeros are neutral for abs-max and the padded tail
        # is sliced off the output.
        flat = jnp.pad(flat, (0, padded - flat.size))
    return flat.reshape(rows, lanes), rows


def _from_slab(out2d, total, orig_shape):
    flat = out2d.reshape(-1)
    if flat.size != total:
        flat = flat[:total]
    return flat.reshape(orig_shape)


# ---------------- wrapper ----------------

def quant_add(x, y, quantization=True, *,
              target_tile_elems=_TARGET_TILE_ELEMS,
              resident_max_elems=_RESIDENT_MAX_ELEMS):
    """Forward pass of QuantAdd."""
    assert x.shape == y.shape and x.dtype == y.dtype
    orig_shape = x.shape
    total = x.size

    lanes = _choose_lanes(total)
    x2d, rows = _to_slab(x, lanes)
    y2d, _ = _to_slab(y, lanes)

    # ---- VMEM-resident single-pass path (small / medium tensors) ----
    if rows * lanes <= resident_max_elems:
        kern = _fused_resident_kernel if quantization else _plain_add_kernel
        out2d = pl.pallas_call(
            kern,
            out_shape=jax.ShapeDtypeStruct((rows, lanes), x.dtype),
            compiler_params=pltpu.CompilerParams(
                vmem_limit_bytes=_VMEM_LIMIT_BYTES),
        )(x2d, y2d)
        return _from_slab(out2d, total, orig_shape)

    # ---- tiled streaming path (large tensors) ----
    mult = _sublane_multiple(x.dtype)
    tm = max(mult, (target_tile_elems // lanes) // mult * mult)
    num_blocks = pl.cdiv(rows, tm)
    grid = (num_blocks,)
    tile_spec = pl.BlockSpec((tm, lanes), lambda i: (i, 0))
    tiled_params = pltpu.CompilerParams(
        dimension_semantics=("parallel",),
        vmem_limit_bytes=_VMEM_LIMIT_BYTES)

    if not quantization:
        out2d = pl.pallas_call(
            _plain_add_kernel,
            out_shape=jax.ShapeDtypeStruct((rows, lanes), x.dtype),
            grid_spec=pltpu.PrefetchScalarGridSpec(
                num_scalar_prefetch=0, grid=grid,
                in_specs=[tile_spec, tile_spec], out_specs=tile_spec),
            compiler_params=tiled_params,
        )(x2d, y2d)
        return _from_slab(out2d, total, orig_shape)

    # Pass 1: per-block partial abs-max for both inputs, one parallel launch.
    masked = (rows % tm) != 0
    amax_kernel = functools.partial(
        _amax2_partials_kernel, tm=tm, rows=rows, masked=masked)
    part_spec = pl.BlockSpec((8, lanes), lambda i: (i, 0))
    px, py = pl.pallas_call(
        amax_kernel,
        out_shape=(jax.ShapeDtypeStruct((num_blocks * 8, lanes), jnp.float32),
                   jax.ShapeDtypeStruct((num_blocks * 8, lanes), jnp.float32)),
        grid_spec=pltpu.PrefetchScalarGridSpec(
            num_scalar_prefetch=0, grid=grid,
            in_specs=[tile_spec, tile_spec],
            out_specs=[part_spec, part_spec]),
        compiler_params=tiled_params,
    )(x2d, y2d)

    # Tiny scalar math in the wrapper: final max of partials + scales.
    ax = jnp.max(px)
    ay = jnp.max(py)
    inv_sx = jnp.where(ax > 0.0, BOUND / jnp.maximum(ax, 1e-30), 0.0)
    inv_sy = jnp.where(ay > 0.0, BOUND / jnp.maximum(ay, 1e-30), 0.0)
    params = jnp.stack(
        [inv_sx, ax / BOUND, inv_sy, ay / BOUND]).astype(jnp.float32)

    # Pass 2: fused fake-quant + add, scales delivered via SMEM.
    out2d = pl.pallas_call(
        _fq_add_kernel,
        out_shape=jax.ShapeDtypeStruct((rows, lanes), x.dtype),
        grid_spec=pltpu.PrefetchScalarGridSpec(
            num_scalar_prefetch=0, grid=grid,
            in_specs=[pl.BlockSpec(memory_space=pltpu.MemorySpace.SMEM),
                      tile_spec, tile_spec],
            out_specs=tile_spec),
        compiler_params=tiled_params,
    )(params, x2d, y2d)
    return _from_slab(out2d, total, orig_shape)


# ---------------- reference (pure JAX) ----------------

def _ref_quant_add(x, y, quantization=True):
    if not quantization:
        return x + y

    def fq(v):
        amax = jnp.max(jnp.abs(v))
        quant_scale = jnp.where(amax > 0.0, BOUND / jnp.maximum(amax, 1e-30), 0.0)
        q = jnp.clip(jnp.round(v * quant_scale), -BOUND, BOUND) * (amax / BOUND)
        return jnp.where(amax > 0.0, q, v)

    return fq(x) + fq(y)


if __name__ == "__main__":
    key = jax.random.PRNGKey(0)
    kx, ky = jax.random.split(key)
    # NCHW, matching PyTorch convention for the module's inputs.
    x = jax.random.normal(kx, (2, 4, 16, 16), dtype=jnp.float32)
    y = jax.random.normal(ky, (2, 4, 16, 16), dtype=jnp.float32)

    out_q = jax.block_until_ready(quant_add(x, y, quantization=True))
    out_nq = jax.block_until_ready(quant_add(x, y, quantization=False))

    assert out_q.shape == x.shape and out_q.dtype == x.dtype
    assert jnp.allclose(out_q, _ref_quant_add(x, y, True), atol=1e-5, rtol=1e-5)
    assert jnp.allclose(out_nq, _ref_quant_add(x, y, False), atol=1e-6, rtol=1e-6)

    # Awkward (non-128-divisible) shape, resident path with tiny zero pad.
    k2x, k2y = jax.random.split(jax.random.PRNGKey(1))
    x2 = jax.random.normal(k2x, (2, 3, 5, 7), dtype=jnp.float32)
    y2 = jax.random.normal(k2y, (2, 3, 5, 7), dtype=jnp.float32)
    out2 = jax.block_until_ready(quant_add(x2, y2, True))
    assert jnp.allclose(out2, _ref_quant_add(x2, y2, True), atol=1e-5, rtol=1e-5)

    # Force the tiled two-pass path at a small shape, including a ragged last
    # row-block (rows=20, tm=8 -> masked amax + uneven grid + SMEM scales).
    k3x, k3y = jax.random.split(jax.random.PRNGKey(2))
    x3 = jax.random.normal(k3x, (5, 4, 32, 32), dtype=jnp.float32)
    y3 = jax.random.normal(k3y, (5, 4, 32, 32), dtype=jnp.float32)
    out3 = jax.block_until_ready(
        quant_add(x3, y3, True, resident_max_elems=0, target_tile_elems=8192))
    assert jnp.allclose(out3, _ref_quant_add(x3, y3, True), atol=1e-5, rtol=1e-5)
    out3n = jax.block_until_ready(
        quant_add(x3, y3, False, resident_max_elems=0, target_tile_elems=8192))
    assert jnp.allclose(out3n, _ref_quant_add(x3, y3, False), atol=1e-6, rtol=1e-6)

    print("KERNEL_OK")
</pallas_src>

<mosaic_0001>
module attributes {stable_mosaic.version = 11 : i64} {
  func.func @_fused_resident_kernel(%arg0: memref<2x1024xf32, #tpu.memory_space<vmem>>, %arg1: memref<2x1024xf32, #tpu.memory_space<vmem>>, %arg2: memref<2x1024xf32, #tpu.memory_space<vmem>>) attributes {dimension_semantics = [], scalar_prefetch = 0 : i64, scratch_operands = 0 : i64, tpu.core_type = #tpu.core_type<tc>} {
    %c0 = arith.constant 0 : index
    %c0_0 = arith.constant 0 : index
    %0 = vector.load %arg0[%c0, %c0_0] : memref<2x1024xf32, #tpu.memory_space<vmem>>, vector<2x1024xf32>
    %c0_1 = arith.constant 0 : index
    %c0_2 = arith.constant 0 : index
    %1 = vector.load %arg1[%c0_1, %c0_2] : memref<2x1024xf32, #tpu.memory_space<vmem>>, vector<2x1024xf32>
    %2 = math.absf %0 : vector<2x1024xf32>
    %3 = vector.shape_cast %2 : vector<2x1024xf32> to vector<1x2x1024xf32>
    %cst = arith.constant dense<0xFF800000> : vector<1xf32>
    %4 = vector.multi_reduction <maximumf>, %3, %cst [1, 2] : vector<1x2x1024xf32> to vector<1xf32>
    %5 = vector.shape_cast %4 : vector<1xf32> to vector<1x1x1xf32>
    %6 = vector.extract %5[0, 0, 0] : f32 from vector<1x1x1xf32>
    %7 = math.absf %1 : vector<2x1024xf32>
    %8 = vector.shape_cast %7 : vector<2x1024xf32> to vector<1x2x1024xf32>
    %cst_3 = arith.constant dense<0xFF800000> : vector<1xf32>
    %9 = vector.multi_reduction <maximumf>, %8, %cst_3 [1, 2] : vector<1x2x1024xf32> to vector<1xf32>
    %10 = vector.shape_cast %9 : vector<1xf32> to vector<1x1x1xf32>
    %11 = vector.extract %10[0, 0, 0] : f32 from vector<1x1x1xf32>
    %cst_4 = arith.constant 0.000000e+00 : f32
    %12 = arith.cmpf ogt, %6, %cst_4 : f32
    %cst_5 = arith.constant 1.000000e-30 : f32
    %13 = arith.maximumf %6, %cst_5 : f32
    %cst_6 = arith.constant 1.270000e+02 : f32
    %14 = arith.divf %cst_6, %13 : f32
    %cst_7 = arith.constant 0.000000e+00 : f32
    %15 = arith.select %12, %14, %cst_7 : f32
    %cst_8 = arith.constant 0.000000e+00 : f32
    %16 = arith.cmpf ogt, %11, %cst_8 : f32
    %cst_9 = arith.constant 1.000000e-30 : f32
    %17 = arith.maximumf %11, %cst_9 : f32
    %cst_10 = arith.constant 1.270000e+02 : f32
    %18 = arith.divf %cst_10, %17 : f32
    %cst_11 = arith.constant 0.000000e+00 : f32
    %19 = arith.select %16, %18, %cst_11 : f32
    %cst_12 = arith.constant 0.00787401571 : f32
    %20 = arith.mulf %6, %cst_12 : f32
    %cst_13 = arith.constant 0.00787401571 : f32
    %21 = arith.mulf %11, %cst_13 : f32
    %22 = vector.broadcast %15 : f32 to vector<2x1024xf32>
    %23 = arith.mulf %0, %22 : vector<2x1024xf32>
    %24 = math.roundeven %23 : vector<2x1024xf32>
    %cst_14 = arith.constant -1.270000e+02 : f32
    %cst_15 = arith.constant 1.270000e+02 : f32
    %25 = vector.broadcast %cst_14 : f32 to vector<2x1024xf32>
    %26 = arith.maximumf %25, %24 : vector<2x1024xf32>
    %27 = vector.broadcast %cst_15 : f32 to vector<2x1024xf32>
    %28 = arith.minimumf %27, %26 : vector<2x1024xf32>
    %29 = vector.broadcast %20 : f32 to vector<2x1024xf32>
    %30 = arith.mulf %28, %29 : vector<2x1024xf32>
    %31 = vector.broadcast %19 : f32 to vector<2x1024xf32>
    %32 = arith.mulf %1, %31 : vector<2x1024xf32>
    %33 = math.roundeven %32 : vector<2x1024xf32>
    %cst_16 = arith.constant -1.270000e+02 : f32
    %cst_17 = arith.constant 1.270000e+02 : f32
    %34 = vector.broadcast %cst_16 : f32 to vector<2x1024xf32>
    %35 = arith.maximumf %34, %33 : vector<2x1024xf32>
    %36 = vector.broadcast %cst_17 : f32 to vector<2x1024xf32>
    %37 = arith.minimumf %36, %35 : vector<2x1024xf32>
    %38 = vector.broadcast %21 : f32 to vector<2x1024xf32>
    %39 = arith.mulf %37, %38 : vector<2x1024xf32>
    %40 = arith.addf %30, %39 : vector<2x1024xf32>
    %c0_18 = arith.constant 0 : index
    %c0_19 = arith.constant 0 : index
    %41 = vector.load %arg2[%c0_18, %c0_19] : memref<2x1024xf32, #tpu.memory_space<vmem>>, vector<2x1024xf32>
    tpu.vector_store %arg2[%c0_18, %c0_19], %40 {strides = array<i32>} : memref<2x1024xf32, #tpu.memory_space<vmem>>, vector<2x1024xf32>,
    return
  }
}

</mosaic_0001>

<llo_original>
// kernel: tpu_custom_call.1
$region0: #{tpu_custom_call.1}
  #allocation0 [shape = 'u32[]', space=smem, size = 0x4, offset = 0x4, fixed_abs, tag = 'smem constant byte address 0x4 - core index']
  #allocation1 [shape = 'u32[144,128]{1,0:T(1,128)}', space=vmem, size = 0x12000, scoped, tag = 'internal scratch']
  %s0 = inlined_call_operand.hbm [shape: f32[2,1024], index: 0, kind: input, shape index: {}]
  %s1 = inlined_call_operand.hbm [shape: f32[2,1024], index: 1, kind: input, shape index: {}]
  %s2 = inlined_call_operand.hbm [shape: f32[2,1024], index: 2, kind: output, shape index: {}]
  %s3 = sld [smem:[#allocation0]]
  $region26: #{tpu_custom_call.1} parent=0
    _
  %s5 = ssub.s32 1, %s3
  %s6 = scalar_select 0, %s5, %s3
  $region1: #{tpu_custom_call.1} parent=0
    #allocation2 [shape = 'u8[8192]{0}', space=vmem, size = 0x2000, scoped, tag = 'input window, operand 0, single buffered']
    #allocation3 [shape = 's32[1]{0}', space=sflag, size = 0x4, scoped, tag = 'scoped memory for tpu_custom_call.1']
    #allocation4 [shape = 's32[1]{0}', space=sflag, size = 0x4, scoped, tag = 'scoped memory for tpu_custom_call.1']
    #allocation5 [shape = 'u8[8192]{0}', space=vmem, size = 0x2000, scoped, tag = 'input window, operand 1, single buffered']
    #allocation6 [shape = 's32[1]{0}', space=sflag, size = 0x4, scoped, tag = 'scoped memory for tpu_custom_call.1']
    #allocation7 [shape = 'u8[8192]{0}', space=vmem, size = 0x2000, scoped, tag = 'output window, operand 0, single buffered']
    %7 = vsyncpa [#allocation3], 0
    %8 = vsyncpa [#allocation6], 0
    %9 = vsyncpa [#allocation4], 0
    // Predicated region
    $region2: #{tpu_custom_call.1} parent=1 // pred_check
      _
    $region3: #{tpu_custom_call.1} parent=1 // pred_check_branch
      %11 = sbr.rel (0) target = $region5
    $region4: #{tpu_custom_call.1} parent=1 // pred_region
      %s13 = ssub.s32 256, 256
      %14 = vsyncadd [#allocation3], %s13
      %s16 = sshll.u32 [#allocation2], 4
      %s17 = int_to_ptr.vmem [resolvable:$true] %s16
      %19 = dma.hbm_to_vmem [thread:$0]  %s0, 256, %s17, [#allocation3]
    $region5: #{tpu_custom_call.1} parent=1 // pred_fallthru
      _
    // Predicated region
    $region6: #{tpu_custom_call.1} parent=1 // pred_check
      _
    $region7: #{tpu_custom_call.1} parent=1 // pred_check_branch
      %21 = sbr.rel (0) target = $region9
    $region8: #{tpu_custom_call.1} parent=1 // pred_region
      %s23 = ssub.s32 256, 256
      %24 = vsyncadd [#allocation6], %s23
      %s26 = sshll.u32 [#allocation5], 4
      %s27 = int_to_ptr.vmem [resolvable:$true] %s26
      %29 = dma.hbm_to_vmem [thread:$0]  %s1, 256, %s27, [#allocation6]
    $region9: #{tpu_custom_call.1} parent=1 // pred_fallthru
      _
    // Predicated region
    $region10: #{tpu_custom_call.1} parent=1 // pred_check
      _
    $region11: #{tpu_custom_call.1} parent=1 // pred_check_branch
      %31 = sbr.rel (0) target = $region13
    $region12: #{tpu_custom_call.1} parent=1 // pred_region
      %32 = dma.done [#allocation3], 256
    $region13: #{tpu_custom_call.1} parent=1 // pred_fallthru
      _
    // Predicated region
    $region14: #{tpu_custom_call.1} parent=1 // pred_check
      _
    $region15: #{tpu_custom_call.1} parent=1 // pred_check_branch
      %34 = sbr.rel (0) target = $region17
    $region16: #{tpu_custom_call.1} parent=1 // pred_region
      %35 = dma.done [#allocation6], 256
    $region17: #{tpu_custom_call.1} parent=1 // pred_fallthru
      _
    %v36 = vld [vmem:[#allocation2] sm:$0xff]
    %v37 = vld [vmem:[#allocation2 + $0x8] sm:$0xff]
    %v38 = vld [vmem:[#allocation5] sm:$0xff]
    %v39 = vld [vmem:[#allocation5 + $0x8] sm:$0xff]
    %v40 = vand.u32 2147483647, %v36
    %v41 = vand.u32 2147483647, %v37
    %v44 = vcombine.high %v40, %v40
    %v46 = vunpack.c.l.s4 1983009808
    %v47 = vunpack.c.0.s8 %v46
    %v48 = vlaneseq
    %v49 = vshrl.u32 %v48, 7
    %v50 = vsub.s32 %v47, %v49
    %v51 = vrot.slane %v40, %v50
    %v53 = vunpack.c.l.s4 1983009808
    %v54 = vunpack.c.0.s8 %v53
    %v55 = vlaneseq
    %v56 = vshrl.u32 %v55, 7
    %v57 = vsub.s32 %v54, %v56
    %v58 = vrot.slane %v44, %v57
    %v59 = vcombine.high %v51, %v51
    %v60 = vcombine.high %v58, %v58
    %v61 = vcombine.high %v41, %v41
    %v63 = vunpack.c.l.s4 1983009808
    %v64 = vunpack.c.0.s8 %v63
    %v65 = vlaneseq
    %v66 = vshrl.u32 %v65, 7
    %v67 = vsub.s32 %v64, %v66
    %v68 = vrot.slane %v41, %v67
    %v70 = vunpack.c.l.s4 1983009808
    %v71 = vunpack.c.0.s8 %v70
    %v72 = vlaneseq
    %v73 = vshrl.u32 %v72, 7
    %v74 = vsub.s32 %v71, %v73
    %v75 = vrot.slane %v61, %v74
    %v76 = vcombine.high %v68, %v68
    %v77 = vcombine.high %v75, %v75
    %vm86 = vcmask 1041408
    %v87 = vsel %vm86, %v51, -inf
    %v88 = vsel %vm86, %v59, -inf
    %v89 = vsel %vm86, %v58, -inf
    %v90 = vsel %vm86, %v60, -inf
    %v91 = vsel %vm86, %v68, -inf
    %v92 = vmax.f32 %v87, %v91
    %v93 = vsel %vm86, %v76, -inf
    %v94 = vmax.f32 %v88, %v93
    %v95 = vsel %vm86, %v75, -inf
    %v96 = vmax.f32 %v89, %v95
    %v97 = vsel %vm86, %v77, -inf
    %v98 = vmax.f32 %v90, %v97
    %v99 = vmax.f32 %v92, %v94
    %v100 = vmax.f32 %v96, %v98
    %v101 = vmax.f32 %v99, %v100
    %102 = vmax.xlane.f32.xlu0 %v101
    %v103 = vpop.xlane.xlu0 %102
    %v104 = vrot.slane %v103, 4
    %v105 = vmax.f32 %v103, %v104
    %v106 = vrot.slane %v105, 2
    %v107 = vmax.f32 %v105, %v106
    %v108 = vrot.slane %v107, 1
    %v109 = vmax.f32 %v107, %v108
    %s110 = vtos %v109
    %v111 = vand.u32 2147483647, %v38
    %v112 = vand.u32 2147483647, %v39
    %v115 = vcombine.high %v111, %v111
    %v117 = vunpack.c.l.s4 1983009808
    %v118 = vunpack.c.0.s8 %v117
    %v119 = vlaneseq
    %v120 = vshrl.u32 %v119, 7
    %v121 = vsub.s32 %v118, %v120
    %v122 = vrot.slane %v111, %v121
    %v124 = vunpack.c.l.s4 1983009808
    %v125 = vunpack.c.0.s8 %v124
    %v126 = vlaneseq
    %v127 = vshrl.u32 %v126, 7
    %v128 = vsub.s32 %v125, %v127
    %v129 = vrot.slane %v115, %v128
    %v130 = vcombine.high %v122, %v122
    %v131 = vcombine.high %v129, %v129
    %v132 = vcombine.high %v112, %v112
    %v134 = vunpack.c.l.s4 1983009808
    %v135 = vunpack.c.0.s8 %v134
    %v136 = vlaneseq
    %v137 = vshrl.u32 %v136, 7
    %v138 = vsub.s32 %v135, %v137
    %v139 = vrot.slane %v112, %v138
    %v141 = vunpack.c.l.s4 1983009808
    %v142 = vunpack.c.0.s8 %v141
    %v143 = vlaneseq
    %v144 = vshrl.u32 %v143, 7
    %v145 = vsub.s32 %v142, %v144
    %v146 = vrot.slane %v132, %v145
    %v147 = vcombine.high %v139, %v139
    %v148 = vcombine.high %v146, %v146
    %v157 = vsel %vm86, %v122, -inf
    %v158 = vsel %vm86, %v130, -inf
    %v159 = vsel %vm86, %v129, -inf
    %v160 = vsel %vm86, %v131, -inf
    %v161 = vsel %vm86, %v139, -inf
    %v162 = vmax.f32 %v157, %v161
    %v163 = vsel %vm86, %v147, -inf
    %v164 = vmax.f32 %v158, %v163
    %v165 = vsel %vm86, %v146, -inf
    %v166 = vmax.f32 %v159, %v165
    %v167 = vsel %vm86, %v148, -inf
    %v168 = vmax.f32 %v160, %v167
    %v169 = vmax.f32 %v162, %v164
    %v170 = vmax.f32 %v166, %v168
    %v171 = vmax.f32 %v169, %v170
    %172 = vmax.xlane.f32.xlu0 %v171
    %v173 = vpop.xlane.xlu0 %172
    %v174 = vrot.slane %v173, 4
    %v175 = vmax.f32 %v173, %v174
    %v176 = vrot.slane %v175, 2
    %v177 = vmax.f32 %v175, %v176
    %v178 = vrot.slane %v177, 1
    %v179 = vmax.f32 %v177, %v178
    %s180 = vtos %v179
    %p181 = scmp.gt.f32.partialorder %s110, 0.0
    %s182 = smax.f32 %s110, 1e-30
    %v183 = vstv %s182
    %v184 = vrcp.pop %v183
    %s185 = vtos %v184
    %s186 = smul.f32 127.0, %s185
    %s187 = scalar_select %p181, %s186, 0.0
    %p188 = scmp.gt.f32.partialorder %s180, 0.0
    %s189 = smax.f32 %s180, 1e-30
    %v190 = vstv %s189
    %v191 = vrcp.pop %v190
    %s192 = vtos %v191
    %s193 = smul.f32 127.0, %s192
    %s194 = scalar_select %p188, %s193, 0.0
    %s195 = smul.f32 %s110, 0.007874016
    %s196 = smul.f32 %s180, 0.007874016
    %v197 = vstv %s187
    %v198 = vmul.f32 %v36, %v197
    %v199 = vmul.f32 %v37, %v197
    %v200 = vround.ne.pseudo %v198
    %v201 = vround.ne.pseudo %v199
    %v202 = vmax.f32 %v200, -127.0
    %v203 = vmax.f32 %v201, -127.0
    %v204 = vmin.f32 %v202, 127.0
    %v205 = vmin.f32 %v203, 127.0
    %v206 = vstv %s195
    %v207 = vmul.f32 %v204, %v206
    %v208 = vmul.f32 %v205, %v206
    %v209 = vstv %s194
    %v210 = vmul.f32 %v38, %v209
    %v211 = vmul.f32 %v39, %v209
    %v212 = vround.ne.pseudo %v210
    %v213 = vround.ne.pseudo %v211
    %v214 = vmax.f32 %v212, -127.0
    %v215 = vmax.f32 %v213, -127.0
    %v216 = vmin.f32 %v214, 127.0
    %v217 = vmin.f32 %v215, 127.0
    %v218 = vstv %s196
    %v219 = vmul.f32 %v216, %v218
    %v220 = vmul.f32 %v217, %v218
    %v221 = vadd.f32 %v207, %v219
    %v222 = vadd.f32 %v208, %v220
    %223 = vst [vmem:[#allocation7] sm:$0xff] %v221
    %224 = vst [vmem:[#allocation7 + $0x8] sm:$0xff] %v222
    // Predicated region
    $region18: #{tpu_custom_call.1} parent=1 // pred_check
      _
    $region19: #{tpu_custom_call.1} parent=1 // pred_check_branch
      %226 = sbr.rel (0) target = $region21
    $region20: #{tpu_custom_call.1} parent=1 // pred_region
      %s228 = ssub.s32 256, 256
      %229 = vsyncadd [#allocation4], %s228
      %s231 = sshll.u32 [#allocation7], 4
      %s232 = int_to_ptr.vmem [resolvable:$true] %s231
      %234 = dma.vmem_to_hbm [thread:$0]  %s232, 256, %s2, [#allocation4]
    $region21: #{tpu_custom_call.1} parent=1 // pred_fallthru
      _
    // Predicated region
    $region22: #{tpu_custom_call.1} parent=1 // pred_check
      _
    $region23: #{tpu_custom_call.1} parent=1 // pred_check_branch
      %236 = sbr.rel (0) target = $region25
    $region24: #{tpu_custom_call.1} parent=1 // pred_region
      %237 = dma.done [#allocation4], 256
    $region25: #{tpu_custom_call.1} parent=1 // pred_fallthru
      _
    %238 = vsyncpa [#allocation3], 1
    %239 = vsyncpa [#allocation6], 1
    %240 = vsyncpa [#allocation4], 1

</llo_original>
